<compile_context>
chip_gen: v5e
topology: v5e:2x2
jax: 0.10.0
libtpu: 0.0.40
codegen_flags: <defaults>
</compile_context>

<pallas_src>
import jax
import jax.numpy as jnp
from jax.experimental import pallas as pl
from jax.experimental.pallas import tpu as pltpu


def _round_up(x, m):
    return ((x + m - 1) // m) * m


def _q_kernel(x_ref, w_ref, b_ref, o_ref):
    # Single fused matmul: bf16 MXU inputs, f32 accumulation, bf16 lane-dense store.
    x = x_ref[...].astype(jnp.bfloat16)  # no-op if the caller already supplies bf16
    q = jnp.dot(x, w_ref[...], preferred_element_type=jnp.float32) + b_ref[...]
    o_ref[...] = q.astype(o_ref.dtype)   # unmasked vst: padded to a multiple of 128 lanes


def init_params(key, in_features, n_actions, hidden_size=64):
    """Synthetic init in the original PyTorch layout (LeCun-normal, zero bias)."""
    k1, k2, k3 = jax.random.split(key, 3)
    w1 = jax.random.normal(k1, (hidden_size, in_features), jnp.float32) / jnp.sqrt(in_features)
    b1 = jnp.zeros((hidden_size,), jnp.float32)
    w2 = jax.random.normal(k2, (hidden_size, hidden_size), jnp.float32) / jnp.sqrt(hidden_size)
    b2 = jnp.zeros((hidden_size,), jnp.float32)
    w3 = jax.random.normal(k3, (n_actions, hidden_size), jnp.float32) / jnp.sqrt(hidden_size)
    shared_bias = jnp.zeros((1,), jnp.float32)  # SingleSharedBias parameter
    return dict(w1=w1, b1=b1, w2=w2, b2=b2, w3=w3, shared_bias=shared_bias)


def prepare_params(params):
    """One-time algebraic fold + layout/dtype conversion (at load time, NOT per call).

    Valid because the module is purely linear:
        q = ((x W1^T + b1) W2^T + b2) W3^T + sb
          = x (W3 W2 W1)^T + (W3 (W2 b1 + b2) + sb)
    """
    w1, b1 = params["w1"], params["b1"]
    w2, b2 = params["w2"], params["b2"]
    w3, shared_bias = params["w3"], params["shared_bias"]

    in_features = w1.shape[1]
    n_actions = w3.shape[0]
    n_pad = _round_up(n_actions, 128)  # lane-dense output width

    # Fold in f32; cast to bf16 exactly once (avoids the old per-layer bf16 roundings).
    w_fused_f32 = (w3 @ w2 @ w1).T                        # [in_features, n_actions]
    b_fused_f32 = w3 @ (w2 @ b1 + b2) + shared_bias[0]    # [n_actions]

    w_fused = jnp.zeros((in_features, n_pad), jnp.bfloat16)
    w_fused = w_fused.at[:, :n_actions].set(w_fused_f32.astype(jnp.bfloat16))
    b_fused = jnp.zeros((1, n_pad), jnp.float32)
    b_fused = b_fused.at[0, :n_actions].set(b_fused_f32)

    return dict(w_fused=w_fused, b_fused=b_fused, n_actions=int(n_actions))


def large_linear_q_forward(x, prepared, *, max_block_rows=2048, megacore_min_blocks=2):
    """x: [B, in_features] float32 or bfloat16. prepared: output of prepare_params()."""
    w, b = prepared["w_fused"], prepared["b_fused"]
    n_actions = prepared["n_actions"]

    B, in_features = x.shape
    assert in_features == w.shape[0]
    n_pad = w.shape[1]

    # cdiv-based batch split: pad by < 8 rows per block instead of up to tb-1 rows,
    # and guarantee >= 2 blocks for non-trivial batches so v7x megacore gets both TCs.
    b8 = _round_up(B, 8)
    nblocks = pl.cdiv(b8, max_block_rows)
    if b8 > 256:
        nblocks = max(nblocks, megacore_min_blocks)
    tb = _round_up(pl.cdiv(b8, nblocks), 8)
    b_pad = nblocks * tb
    if b_pad != B:
        x = jnp.pad(x, ((0, b_pad - B), (0, 0)))

    out = pl.pallas_call(
        _q_kernel,
        out_shape=jax.ShapeDtypeStruct((b_pad, n_pad), jnp.bfloat16),
        grid_spec=pltpu.PrefetchScalarGridSpec(
            num_scalar_prefetch=0,
            grid=(nblocks,),
            in_specs=[
                pl.BlockSpec((tb, in_features), lambda i: (i, 0)),     # x  (streamed)
                pl.BlockSpec((in_features, n_pad), lambda i: (0, 0)),  # fused weight (resident)
                pl.BlockSpec((1, n_pad), lambda i: (0, 0)),            # fused bias   (resident)
            ],
            out_specs=pl.BlockSpec((tb, n_pad), lambda i: (i, 0)),
        ),
        compiler_params=pltpu.CompilerParams(
            dimension_semantics=("parallel",)),
    )(x, w, b)

    # Drop batch padding and dead action lanes; the f32 cast fuses with this slice.
    return out[:B, :n_actions].astype(jnp.float32)


def _reference(x, raw):
    ref = x @ raw["w1"].T + raw["b1"]
    ref = ref @ raw["w2"].T + raw["b2"]
    ref = ref @ raw["w3"].T + raw["shared_bias"][0]
    return ref


if __name__ == "__main__":
    in_features, n_actions, hidden_size = 32, 6, 64

    key = jax.random.PRNGKey(0)
    kx, kp = jax.random.split(key)

    raw = init_params(kp, in_features, n_actions, hidden_size)
    # Nonzero shared bias so the SingleSharedBias path is exercised.
    raw["shared_bias"] = jnp.array([0.25], jnp.float32)

    params = prepare_params(raw)  # one-time fold + layout/dtype conversion
    fwd = jax.jit(lambda xin: large_linear_q_forward(xin, params))

    # Case 1: small batch, single block, no padding.
    x = jax.random.normal(kx, (8, in_features), jnp.float32)
    q = jax.block_until_ready(fwd(x))
    ref = _reference(x, raw)
    assert q.shape == (8, n_actions)
    assert jnp.allclose(q, ref, atol=5e-2, rtol=5e-2), float(jnp.max(jnp.abs(q - ref)))

    # Case 2: batch not a multiple of 8 (exercises sublane padding + slicing).
    x2 = jax.random.normal(jax.random.PRNGKey(1), (20, in_features), jnp.float32)
    q2 = jax.block_until_ready(fwd(x2))
    ref2 = _reference(x2, raw)
    assert q2.shape == (20, n_actions)
    assert jnp.allclose(q2, ref2, atol=5e-2, rtol=5e-2), float(jnp.max(jnp.abs(q2 - ref2)))

    # Case 3: batch > 256 (exercises the >=2-block split used for v7x megacore).
    x3 = jax.random.normal(jax.random.PRNGKey(2), (300, in_features), jnp.float32)
    q3 = jax.block_until_ready(fwd(x3))
    ref3 = _reference(x3, raw)
    assert q3.shape == (300, n_actions)
    assert jnp.allclose(q3, ref3, atol=5e-2, rtol=5e-2), float(jnp.max(jnp.abs(q3 - ref3)))

    print("KERNEL_OK")
</pallas_src>

<mosaic_0001>
module attributes {stable_mosaic.version = 11 : i64} {
  func.func @_q_kernel(%arg0: i32, %arg1: memref<8x32xf32, #tpu.memory_space<vmem>>, %arg2: memref<32x128xbf16, #tpu.memory_space<vmem>>, %arg3: memref<1x128xf32, #tpu.memory_space<vmem>>, %arg4: memref<8x128xbf16, #tpu.memory_space<vmem>>) attributes {dimension_semantics = [#tpu.dimension_semantics<parallel>], iteration_bounds = array<i64: 1>, scalar_prefetch = 0 : i64, scratch_operands = 0 : i64, tpu.core_type = #tpu.core_type<tc>, window_params = [{transform_indices = @transform_0, window_bounds = array<i64: 8, 32>}, {pipeline_mode = #tpu.pipeline_mode<synchronous>, transform_indices = @transform_1, window_bounds = array<i64: 32, 128>}, {pipeline_mode = #tpu.pipeline_mode<synchronous>, transform_indices = @transform_2, window_bounds = array<i64: 1, 128>}, {transform_indices = @transform_3, window_bounds = array<i64: 8, 128>}]} {
    %c0 = arith.constant 0 : index
    %c0_0 = arith.constant 0 : index
    %0 = vector.load %arg1[%c0, %c0_0] : memref<8x32xf32, #tpu.memory_space<vmem>>, vector<8x32xf32>
    %1 = arith.truncf %0 : vector<8x32xf32> to vector<8x32xbf16>
    %c0_1 = arith.constant 0 : index
    %c0_2 = arith.constant 0 : index
    %2 = vector.load %arg2[%c0_1, %c0_2] : memref<32x128xbf16, #tpu.memory_space<vmem>>, vector<32x128xbf16>
    %cst = arith.constant dense<0.000000e+00> : vector<8x128xf32>
    %3 = tpu.matmul %1, %2, %cst {dimension_numbers = #tpu.dot_dimension_numbers<[1], [0], [0], [1], [0, 0, 1, 1], [], []>} : vector<8x32xbf16>, vector<32x128xbf16>, vector<8x128xf32> -> vector<8x128xf32>
    %c0_3 = arith.constant 0 : index
    %c0_4 = arith.constant 0 : index
    %4 = vector.load %arg3[%c0_3, %c0_4] : memref<1x128xf32, #tpu.memory_space<vmem>>, vector<1x128xf32>
    %5 = vector.broadcast %4 : vector<1x128xf32> to vector<8x128xf32>
    %6 = arith.addf %3, %5 : vector<8x128xf32>
    %7 = arith.truncf %6 : vector<8x128xf32> to vector<8x128xbf16>
    %c0_5 = arith.constant 0 : index
    %c0_6 = arith.constant 0 : index
    %8 = vector.load %arg4[%c0_5, %c0_6] : memref<8x128xbf16, #tpu.memory_space<vmem>>, vector<8x128xbf16>
    tpu.vector_store %arg4[%c0_5, %c0_6], %7 {strides = array<i32>} : memref<8x128xbf16, #tpu.memory_space<vmem>>, vector<8x128xbf16>,
    return
  }
  func.func @transform_0(%arg0: i32) -> (i32, i32) {
    %c0_i32 = arith.constant 0 : i32
    %c0_i32_0 = arith.constant 0 : i32
    return %arg0, %c0_i32 : i32, i32
  }
  func.func @transform_1(%arg0: i32) -> (i32, i32) {
    %c0_i32 = arith.constant 0 : i32
    %c0_i32_0 = arith.constant 0 : i32
    %c0_i32_1 = arith.constant 0 : i32
    return %c0_i32, %c0_i32_0 : i32, i32
  }
  func.func @transform_2(%arg0: i32) -> (i32, i32) {
    %c0_i32 = arith.constant 0 : i32
    %c0_i32_0 = arith.constant 0 : i32
    %c0_i32_1 = arith.constant 0 : i32
    return %c0_i32, %c0_i32_0 : i32, i32
  }
  func.func @transform_3(%arg0: i32) -> (i32, i32) {
    %c0_i32 = arith.constant 0 : i32
    %c0_i32_0 = arith.constant 0 : i32
    return %arg0, %c0_i32 : i32, i32
  }
}

</mosaic_0001>

<llo_original>
// kernel: _lambda_.1
$region0: #{_lambda_.1}
  #allocation0 [shape = 'u32[]', space=smem, size = 0x4, offset = 0x4, fixed_abs, tag = 'smem constant byte address 0x4 - core index']
  #allocation1 [shape = 'u32[72,128]{1,0:T(1,128)}', space=vmem, size = 0x9000, scoped, tag = 'internal scratch']
  %s0 = inlined_call_operand.hbm [shape: f32[8,32], index: 0, kind: input, shape index: {}]
  %s1 = inlined_call_operand.hbm [shape: bf16[32,128], index: 1, kind: input, shape index: {}]
  %s2 = inlined_call_operand.vmem [shape: f32[1,128], index: 2, kind: input, shape index: {}]
  %s3 = inlined_call_operand.vmem [shape: bf16[8,128], index: 3, kind: output, shape index: {}]
  %s4 = sld [smem:[#allocation0]]
  $region30: #{_lambda_.1} parent=0
    _
  %s6 = ssub.s32 1, %s4
  %s7 = scalar_select 0, %s6, %s4
  $region1: #{_lambda_.1} parent=0
    #allocation2 [shape = 'u8[4096]{0}', space=vmem, size = 0x1000, scoped, tag = 'input window, operand 0, single buffered']
    #allocation3 [shape = 's32[1]{0}', space=sflag, size = 0x4, scoped, tag = 'scoped memory for _lambda_.1']
    #allocation4 [shape = 'u8[8192]{0}', space=vmem, size = 0x2000, scoped, tag = 'input window, operand 1, single buffered']
    #allocation5 [shape = 's32[1]{0}', space=sflag, size = 0x4, scoped, tag = 'scoped memory for _lambda_.1']
    %8 = vsyncpa [#allocation3], 0
    %9 = vsyncpa [#allocation5], 0
    // Predicated region
    $region2: #{_lambda_.1} parent=1 // pred_check
      _
    $region3: #{_lambda_.1} parent=1 // pred_check_branch
      %11 = sbr.rel (0) target = $region5
    $region4: #{_lambda_.1} parent=1 // pred_region
      %13 = vsyncadd [#allocation3], 0
      %s15 = sshll.u32 %s0, 4
      %s16 = int_to_ptr.hbm [resolvable:$true] %s15
      %s17 = sshll.u32 [#allocation2], 4
      %s18 = int_to_ptr.vmem [resolvable:$true] %s17
      %20 = dma.hbm_to_vmem [thread:$0]  %s16, 128, %s18, [#allocation3]
    $region5: #{_lambda_.1} parent=1 // pred_fallthru
      _
    // Predicated region
    $region6: #{_lambda_.1} parent=1 // pred_check
      _
    $region7: #{_lambda_.1} parent=1 // pred_check_branch
      %22 = sbr.rel (0) target = $region9
    $region8: #{_lambda_.1} parent=1 // pred_region
      %24 = vsyncadd [#allocation5], 0
      %s25 = sshll.u32 %s1, 4
      %s26 = int_to_ptr.hbm [resolvable:$true] %s25
      %s27 = sshll.u32 [#allocation4], 4
      %s28 = int_to_ptr.vmem [resolvable:$true] %s27
      %33 = dma.hbm_to_vmem [thread:$0]  %s26, 256, %s28, [#allocation5], 64, 64, 4
    $region9: #{_lambda_.1} parent=1 // pred_fallthru
      _
    // Predicated region
    $region10: #{_lambda_.1} parent=1 // pred_check
      _
    $region11: #{_lambda_.1} parent=1 // pred_check_branch
      %35 = sbr.rel (0) target = $region13
    $region12: #{_lambda_.1} parent=1 // pred_region
      _
    $region13: #{_lambda_.1} parent=1 // pred_fallthru
      _
    // Predicated region
    $region14: #{_lambda_.1} parent=1 // pred_check
      _
    $region15: #{_lambda_.1} parent=1 // pred_check_branch
      %37 = sbr.rel (0) target = $region17
    $region16: #{_lambda_.1} parent=1 // pred_region
      %39 = dma.done [#allocation3], 128
    $region17: #{_lambda_.1} parent=1 // pred_fallthru
      _
    // Predicated region
    $region18: #{_lambda_.1} parent=1 // pred_check
      _
    $region19: #{_lambda_.1} parent=1 // pred_check_branch
      %41 = sbr.rel (0) target = $region21
    $region20: #{_lambda_.1} parent=1 // pred_region
      %43 = dma.done [#allocation5], 256
    $region21: #{_lambda_.1} parent=1 // pred_fallthru
      _
    %v45 = vld [vmem:[#allocation2] sm:$0xff]
    %v46 = vpack.c.bf16 %v45, %v45
    %v47 = vld [vmem:[#allocation4] sm:$0xf]
    %v48 = vld [vmem:[#allocation4 + $0x4] sm:$0xf]
    %v49 = vld [vmem:[#allocation4 + $0x8] sm:$0xf]
    %v50 = vld [vmem:[#allocation4 + $0xc] sm:$0xf]
    %v51 = vld [vmem:[%s2] sm:$0x1]
    %v53 = vperm.slane %v51, 0
    %v59 = vunpack.c.l.b16 %v47
    %v60 = vunpack.c.l.b16 %v48
    %v61 = vunpack.c.l.b16 %v49
    %v62 = vunpack.c.l.b16 %v50
    %v63 = vpack.c.b16 %v60, %v59
    %v64 = vpack.c.b16 %v62, %v61
    %vm67 = vcmask 261120
    %v69 = vsel %vm67, %v46, 0
    %71 = vmatpush.bf16.msra.mxu0 0
    %72 = vmatpush.bf16.msra.mxu0 0
    %73 = vmatpush.bf16.msra.mxu0 0
    %74 = vmatpush.bf16.msra.mxu0 0
    %75 = vmatpush.bf16.msra.mxu0 0
    %76 = vmatpush.bf16.msra.mxu0 0
    %77 = vmatpush.bf16.msra.mxu0 %v64
    %78 = vmatpush.bf16.msra.mxu0 %v63
    %79 = vmatmul.bf16.gmra.mxu0 %v69
    %v80 = vpop.f32.mrf.mxu0
    %v81 = vadd.f32 %v53, %v80
    %v82 = vpop.f32.mrf.mxu0
    %83 = vdwg.mxu0
    %v84 = vpack.c.bf16 %v81, %v81
    %85 = vst [vmem:[%s3] sm:$0xf] %v84
    // Predicated region
    $region22: #{_lambda_.1} parent=1 // pred_check
      _
    $region23: #{_lambda_.1} parent=1 // pred_check_branch
      %87 = sbr.rel (0) target = $region25
    $region24: #{_lambda_.1} parent=1 // pred_region
      _
    $region25: #{_lambda_.1} parent=1 // pred_fallthru
      _
    // Predicated region
    $region26: #{_lambda_.1} parent=1 // pred_check
      _
    $region27: #{_lambda_.1} parent=1 // pred_check_branch
      %89 = sbr.rel (0) target = $region29
    $region28: #{_lambda_.1} parent=1 // pred_region
      _
    $region29: #{_lambda_.1} parent=1 // pred_fallthru
      _
    %90 = vsyncpa [#allocation3], 1
    %91 = vsyncpa [#allocation5], 1

</llo_original>
